<compile_context>
chip_gen: v7x
topology: tpu7x:2x2x1
jax: 0.10.0
libtpu: 0.0.40
codegen_flags: <defaults>
</compile_context>

<pallas_src>
import jax
import jax.numpy as jnp
from jax.experimental import pallas as pl
from jax.experimental.pallas import tpu as pltpu


def _round_up(n, m):
    return ((n + m - 1) // m) * m


def qnet3_kernel(x_ref, w1_ref, b1_ref, w2_ref, b2_ref, out_ref):
    # x_ref : (n_in, TB)   bf16   (batch on lanes)
    # w1_ref: (32, n_in)   bf16   (PyTorch (out, in) layout, no transpose needed)
    # b1_ref: (32, 1)      f32
    # w2_ref: (n_out, 32)  bf16
    # b2_ref: (n_out, 1)   f32
    # out_ref: (n_out, TB)
    h = jnp.dot(w1_ref[...], x_ref[...],
                preferred_element_type=jnp.float32)           # (32, TB) f32 acc
    h = jnp.maximum(h + b1_ref[...], 0.0)                     # f32 epilogue (v5e-safe)
    o = jnp.dot(w2_ref[...], h.astype(jnp.bfloat16),
                preferred_element_type=jnp.float32)           # (n_out, TB)
    out_ref[...] = (o + b2_ref[...]).astype(out_ref.dtype)


def _choose_batch_tiling(B, tb_target):
    """Pick (tb, Bp): a 128-multiple lane tile and padded batch.

    Prefers fat tiles (~tb_target lanes) so each grid step moves enough HBM
    bytes to amortize per-step overhead, keeps over-padding small by choosing
    tb as a divisor of round_up(B, 128) when possible, and makes sure the
    grid has >= 2 steps whenever B spans more than one 128-lane block so the
    "parallel" batch axis can shard across v7x's two TensorCores.
    """
    m = _round_up(B, 128) // 128                 # number of 128-lane blocks
    dmax = max(1, min(m, tb_target // 128))
    # Largest divisor of m not exceeding dmax -> zero padding beyond 128 round-up.
    d = max(k for k in range(1, dmax + 1) if m % k == 0)
    # Degenerate divisor structure (e.g. m prime): accept a little over-padding
    # (< one tile) to keep tiles fat rather than falling back to tb=128.
    if d * 128 < min(m * 128, 1024):
        d = dmax
    # Ensure >= 2 grid steps when possible (v7x megacore; harmless elsewhere).
    if d >= m and m >= 2:
        d = (m + 1) // 2
    tb = d * 128
    Bp = _round_up(B, tb)
    return tb, Bp


def qnetwork3_forward(x, w1, b1, w2, b2, *, tb_target=8192,
                      small_batch_cutoff=1024, out_dtype=jnp.float32):
    """x: (B, n_input) f32; w1: (32, n_input); b1: (32,);
    w2: (n_output, 32); b2: (n_output,).  Returns (B, n_output) `out_dtype`."""
    B, n_in = x.shape
    hidden = w1.shape[0]
    n_out = w2.shape[0]

    # Weights/biases: cast once; they stay VMEM-resident across the whole grid.
    w1b = w1.astype(jnp.bfloat16)                              # (hidden, n_in)
    w2b = w2.astype(jnp.bfloat16)                              # (n_out, hidden)
    b1c = b1.reshape(hidden, 1).astype(jnp.float32)
    b2c = b2.reshape(n_out, 1).astype(jnp.float32)

    if B <= small_batch_cutoff:
        # Small-batch fast path: no pad / no trailing slice; one grid step with
        # full-array block shapes (legal even when last dim isn't 128-aligned).
        tb, Bp = B, B
    else:
        tb, Bp = _choose_batch_tiling(B, tb_target)

    # Layout plumbing (fuses into one HBM pass under jit): bf16 cast FIRST so
    # the pad/transpose pass moves half the bytes; batch goes to the lane dim.
    x_bf = x.astype(jnp.bfloat16)
    if Bp != B:
        x_bf = jnp.pad(x_bf, ((0, Bp - B), (0, 0)))
    x_t = x_bf.T                                               # (n_in, Bp) bf16

    grid = (Bp // tb,)

    out_itemsize = jnp.dtype(out_dtype).itemsize
    flops = 2 * Bp * (n_in * hidden + hidden * n_out)
    bytes_accessed = (n_in * Bp * 2 + n_out * Bp * out_itemsize
                      + w1b.size * 2 + w2b.size * 2 + (hidden + n_out) * 4)

    out_t = pl.pallas_call(
        qnet3_kernel,
        out_shape=jax.ShapeDtypeStruct((n_out, Bp), out_dtype),
        grid=grid,
        in_specs=[
            pl.BlockSpec((n_in, tb), lambda i: (0, i)),        # x: streams over batch
            pl.BlockSpec((hidden, n_in), lambda i: (0, 0)),    # W1 resident
            pl.BlockSpec((hidden, 1), lambda i: (0, 0)),       # b1 resident
            pl.BlockSpec((n_out, hidden), lambda i: (0, 0)),   # W2 resident
            pl.BlockSpec((n_out, 1), lambda i: (0, 0)),        # b2 resident
        ],
        out_specs=pl.BlockSpec((n_out, tb), lambda i: (0, i)),
        compiler_params=pltpu.CompilerParams(
            dimension_semantics=("parallel",),    # shard batch across v7x's 2 TCs
            vmem_limit_bytes=32 * 1024 * 1024,    # fat tiles still need only ~2 MiB
        ),
        cost_estimate=pl.CostEstimate(
            flops=flops, transcendentals=0, bytes_accessed=bytes_accessed),
    )(x_t, w1b, b1c, w2b, b2c)

    # Slice padded columns off before the (tiny) output transpose.
    return (out_t[:, :B] if Bp != B else out_t).T              # (B, n_out)


def init_params(key, n_input, n_output, hidden=32):
    """PyTorch nn.Linear default init: U(-1/sqrt(fan_in), 1/sqrt(fan_in)),
    stored PyTorch-style as (out_features, in_features)."""
    k1, k2, k3, k4 = jax.random.split(key, 4)
    bound1 = 1.0 / jnp.sqrt(jnp.float32(n_input))
    bound2 = 1.0 / jnp.sqrt(jnp.float32(hidden))
    w1 = jax.random.uniform(k1, (hidden, n_input), jnp.float32, -bound1, bound1)
    b1 = jax.random.uniform(k2, (hidden,), jnp.float32, -bound1, bound1)
    w2 = jax.random.uniform(k3, (n_output, hidden), jnp.float32, -bound2, bound2)
    b2 = jax.random.uniform(k4, (n_output,), jnp.float32, -bound2, bound2)
    return w1, b1, w2, b2


def _reference(x, w1, b1, w2, b2):
    # Reference with matching bf16 MXU-input casts (f32 accumulate/epilogue).
    xb = x.astype(jnp.bfloat16)
    h = jnp.dot(xb, w1.astype(jnp.bfloat16).T,
                preferred_element_type=jnp.float32) + b1
    h = jnp.maximum(h, 0.0)
    return jnp.dot(h.astype(jnp.bfloat16), w2.astype(jnp.bfloat16).T,
                   preferred_element_type=jnp.float32) + b2


if __name__ == "__main__":
    # Small shapes consistent with an RL Q-network (CartPole-like obs).
    n_input, n_output = 4, 2

    key = jax.random.PRNGKey(0)
    kx1, kx2, kp = jax.random.split(key, 3)
    w1, b1, w2, b2 = init_params(kp, n_input, n_output)

    fwd = jax.jit(qnetwork3_forward)   # fuses cast/pad/transpose into one pass

    # 1) Small-batch fast path (no pad / no slice, single grid step).
    x_small = jax.random.normal(kx1, (2, n_input), jnp.float32)
    out_small = jax.block_until_ready(fwd(x_small, w1, b1, w2, b2))
    assert out_small.shape == (2, n_output)
    assert jnp.allclose(out_small, _reference(x_small, w1, b1, w2, b2),
                        atol=1e-3, rtol=1e-3)
    # Loose sanity check vs pure-f32 PyTorch-semantics forward (bf16 MXU inputs
    # are an intentional, tiny precision change).
    ref_f32 = jnp.maximum(x_small @ w1.T + b1, 0.0) @ w2.T + b2
    assert jnp.allclose(out_small, ref_f32, atol=5e-2, rtol=5e-2)

    # 2) Tiled path (padding + multi-step grid across the batch).
    x_big = jax.random.normal(kx2, (1500, n_input), jnp.float32)
    out_big = jax.block_until_ready(fwd(x_big, w1, b1, w2, b2))
    assert out_big.shape == (1500, n_output)
    assert jnp.allclose(out_big, _reference(x_big, w1, b1, w2, b2),
                        atol=1e-3, rtol=1e-3)

    print("KERNEL_OK")
</pallas_src>

<mosaic_0001>
module attributes {stable_mosaic.version = 11 : i64} {
  func.func @qnet3_kernel(%arg0: i32, %arg1: memref<4x2xbf16, #tpu.memory_space<vmem>>, %arg2: memref<32x4xbf16, #tpu.memory_space<vmem>>, %arg3: memref<32x1xf32, #tpu.memory_space<vmem>>, %arg4: memref<2x32xbf16, #tpu.memory_space<vmem>>, %arg5: memref<2x1xf32, #tpu.memory_space<vmem>>, %arg6: memref<2x2xf32, #tpu.memory_space<vmem>>) attributes {dimension_semantics = [#tpu.dimension_semantics<parallel>], iteration_bounds = array<i64: 1>, scalar_prefetch = 0 : i64, scratch_operands = 0 : i64, tpu.core_type = #tpu.core_type<tc>, window_params = [{transform_indices = @transform_0, window_bounds = array<i64: 4, 2>}, {pipeline_mode = #tpu.pipeline_mode<synchronous>, transform_indices = @transform_1, window_bounds = array<i64: 32, 4>}, {pipeline_mode = #tpu.pipeline_mode<synchronous>, transform_indices = @transform_2, window_bounds = array<i64: 32, 1>}, {pipeline_mode = #tpu.pipeline_mode<synchronous>, transform_indices = @transform_3, window_bounds = array<i64: 2, 32>}, {pipeline_mode = #tpu.pipeline_mode<synchronous>, transform_indices = @transform_4, window_bounds = array<i64: 2, 1>}, {transform_indices = @transform_5, window_bounds = array<i64: 2, 2>}]} {
    %c0 = arith.constant 0 : index
    %c0_0 = arith.constant 0 : index
    %0 = vector.load %arg2[%c0, %c0_0] : memref<32x4xbf16, #tpu.memory_space<vmem>>, vector<32x4xbf16>
    %c0_1 = arith.constant 0 : index
    %c0_2 = arith.constant 0 : index
    %1 = vector.load %arg1[%c0_1, %c0_2] : memref<4x2xbf16, #tpu.memory_space<vmem>>, vector<4x2xbf16>
    %cst = arith.constant dense<0.000000e+00> : vector<32x2xf32>
    %2 = tpu.matmul %0, %1, %cst {dimension_numbers = #tpu.dot_dimension_numbers<[1], [0], [0], [1], [0, 0, 1, 1], [], []>} : vector<32x4xbf16>, vector<4x2xbf16>, vector<32x2xf32> -> vector<32x2xf32>
    %c0_3 = arith.constant 0 : index
    %c0_4 = arith.constant 0 : index
    %3 = vector.load %arg3[%c0_3, %c0_4] : memref<32x1xf32, #tpu.memory_space<vmem>>, vector<32x1xf32>
    %4 = vector.broadcast %3 : vector<32x1xf32> to vector<32x2xf32>
    %5 = arith.addf %2, %4 : vector<32x2xf32>
    %cst_5 = arith.constant 0.000000e+00 : f32
    %6 = vector.broadcast %cst_5 : f32 to vector<32x2xf32>
    %7 = arith.maximumf %5, %6 : vector<32x2xf32>
    %c0_6 = arith.constant 0 : index
    %c0_7 = arith.constant 0 : index
    %8 = vector.load %arg4[%c0_6, %c0_7] : memref<2x32xbf16, #tpu.memory_space<vmem>>, vector<2x32xbf16>
    %9 = arith.truncf %7 : vector<32x2xf32> to vector<32x2xbf16>
    %cst_8 = arith.constant dense<0.000000e+00> : vector<2x2xf32>
    %10 = tpu.matmul %8, %9, %cst_8 {dimension_numbers = #tpu.dot_dimension_numbers<[1], [0], [0], [1], [0, 0, 1, 1], [], []>} : vector<2x32xbf16>, vector<32x2xbf16>, vector<2x2xf32> -> vector<2x2xf32>
    %c0_9 = arith.constant 0 : index
    %c0_10 = arith.constant 0 : index
    %11 = vector.load %arg5[%c0_9, %c0_10] : memref<2x1xf32, #tpu.memory_space<vmem>>, vector<2x1xf32>
    %12 = vector.broadcast %11 : vector<2x1xf32> to vector<2x2xf32>
    %13 = arith.addf %10, %12 : vector<2x2xf32>
    %c0_11 = arith.constant 0 : index
    %c0_12 = arith.constant 0 : index
    %14 = vector.load %arg6[%c0_11, %c0_12] : memref<2x2xf32, #tpu.memory_space<vmem>>, vector<2x2xf32>
    tpu.vector_store %arg6[%c0_11, %c0_12], %13 {strides = array<i32>} : memref<2x2xf32, #tpu.memory_space<vmem>>, vector<2x2xf32>,
    return
  }
  func.func @transform_0(%arg0: i32) -> (i32, i32) {
    %c0_i32 = arith.constant 0 : i32
    %c0_i32_0 = arith.constant 0 : i32
    return %c0_i32, %arg0 : i32, i32
  }
  func.func @transform_1(%arg0: i32) -> (i32, i32) {
    %c0_i32 = arith.constant 0 : i32
    %c0_i32_0 = arith.constant 0 : i32
    %c0_i32_1 = arith.constant 0 : i32
    return %c0_i32, %c0_i32_0 : i32, i32
  }
  func.func @transform_2(%arg0: i32) -> (i32, i32) {
    %c0_i32 = arith.constant 0 : i32
    %c0_i32_0 = arith.constant 0 : i32
    %c0_i32_1 = arith.constant 0 : i32
    return %c0_i32, %c0_i32_0 : i32, i32
  }
  func.func @transform_3(%arg0: i32) -> (i32, i32) {
    %c0_i32 = arith.constant 0 : i32
    %c0_i32_0 = arith.constant 0 : i32
    %c0_i32_1 = arith.constant 0 : i32
    return %c0_i32, %c0_i32_0 : i32, i32
  }
  func.func @transform_4(%arg0: i32) -> (i32, i32) {
    %c0_i32 = arith.constant 0 : i32
    %c0_i32_0 = arith.constant 0 : i32
    %c0_i32_1 = arith.constant 0 : i32
    return %c0_i32, %c0_i32_0 : i32, i32
  }
  func.func @transform_5(%arg0: i32) -> (i32, i32) {
    %c0_i32 = arith.constant 0 : i32
    %c0_i32_0 = arith.constant 0 : i32
    return %c0_i32, %arg0 : i32, i32
  }
}

</mosaic_0001>

<llo_original>
// kernel: qnetwork3_forward.1
$region0: #{qnetwork3_forward.1}
  #allocation0 [shape = 'u32[]', space=smem, size = 0x4, offset = 0x4, fixed_abs, tag = 'smem constant byte address 0x4 - core index']
  #allocation1 [shape = 'u32[144,128]{1,0:T(1,128)}', space=vmem, size = 0x12000, scoped, tag = 'internal scratch']
  %s0 = inlined_call_operand.vmem [shape: bf16[4,2], index: 0, kind: input, shape index: {}]
  %s1 = inlined_call_operand.vmem [shape: bf16[32,4], index: 1, kind: input, shape index: {}]
  %s2 = inlined_call_operand.vmem [shape: f32[32,1], index: 2, kind: input, shape index: {}]
  %s3 = inlined_call_operand.vmem [shape: bf16[2,32], index: 3, kind: input, shape index: {}]
  %s4 = inlined_call_operand.vmem [shape: f32[2,1], index: 4, kind: input, shape index: {}]
  %s5 = inlined_call_operand.vmem [shape: f32[2,2], index: 5, kind: output, shape index: {}]
  %s6 = sld [smem:[#allocation0]]
  $region30: #{qnetwork3_forward.1} parent=0
    _
  %s8 = ssub.s32 1, %s6
  %s9 = scalar_select 0, %s8, %s6
  // Predicated region
  $region2: #{qnetwork3_forward.1} parent=0 // pred_check
    _
  $region3: #{qnetwork3_forward.1} parent=0 // pred_check_branch
    %11 = sbr.rel (0) target = $region5
  $region4: #{qnetwork3_forward.1} parent=0 // pred_region
    _
  $region5: #{qnetwork3_forward.1} parent=0 // pred_fallthru
    _
  // Predicated region
  $region6: #{qnetwork3_forward.1} parent=0 // pred_check
    _
  $region7: #{qnetwork3_forward.1} parent=0 // pred_check_branch
    %13 = sbr.rel (0) target = $region9
  $region8: #{qnetwork3_forward.1} parent=0 // pred_region
    _
  $region9: #{qnetwork3_forward.1} parent=0 // pred_fallthru
    _
  // Predicated region
  $region10: #{qnetwork3_forward.1} parent=0 // pred_check
    _
  $region11: #{qnetwork3_forward.1} parent=0 // pred_check_branch
    %15 = sbr.rel (0) target = $region13
  $region12: #{qnetwork3_forward.1} parent=0 // pred_region
    _
  $region13: #{qnetwork3_forward.1} parent=0 // pred_fallthru
    _
  // Predicated region
  $region14: #{qnetwork3_forward.1} parent=0 // pred_check
    _
  $region15: #{qnetwork3_forward.1} parent=0 // pred_check_branch
    %17 = sbr.rel (0) target = $region17
  $region16: #{qnetwork3_forward.1} parent=0 // pred_region
    _
  $region17: #{qnetwork3_forward.1} parent=0 // pred_fallthru
    _
  // Predicated region
  $region18: #{qnetwork3_forward.1} parent=0 // pred_check
    _
  $region19: #{qnetwork3_forward.1} parent=0 // pred_check_branch
    %19 = sbr.rel (0) target = $region21
  $region20: #{qnetwork3_forward.1} parent=0 // pred_region
    _
  $region21: #{qnetwork3_forward.1} parent=0 // pred_fallthru
    _
  %v21 = vld [vmem:[%s1] sm:$0xf]
  %v22 = vld [vmem:[%s1 + $0x4] sm:$0xf]
  %v23 = vld [vmem:[%s1 + $0x8] sm:$0xf]
  %v24 = vld [vmem:[%s1 + $0xc] sm:$0xf]
  %v25 = vld [vmem:[%s0] sm:$0x3]
  %v26 = vld [vmem:[%s2] sm:$0xff]
  %v27 = vld [vmem:[%s2 + $0x8] sm:$0xff]
  %v28 = vld [vmem:[%s2 + $0x10] sm:$0xff]
  %v29 = vld [vmem:[%s2 + $0x18] sm:$0xff]
  %31 = vset.pattern.permute.xlu0 0
  %32 = vperm.xlu0 %31, %v26
  %v33 = vpop.permute.xlu0 %32
  %36 = vset.pattern.permute.xlu0 0
  %37 = vperm.xlu0 %36, %v27
  %v38 = vpop.permute.xlu0 %37
  %41 = vset.pattern.permute.xlu0 0
  %42 = vperm.xlu0 %41, %v28
  %v43 = vpop.permute.xlu0 %42
  %46 = vset.pattern.permute.xlu0 0
  %47 = vperm.xlu0 %46, %v29
  %v48 = vpop.permute.xlu0 %47
  %v54 = vunpack.c.l.b16 %v21
  %v55 = vunpack.c.l.b16 %v22
  %v56 = vunpack.c.l.b16 %v23
  %v57 = vunpack.c.l.b16 %v24
  %v58 = vpack.c.b16 %v55, %v54
  %v59 = vpack.c.b16 %v57, %v56
  %vm60 = vcmask 31744
  %v62 = vsel %vm60, %v58, 0
  %v65 = vsel %vm60, %v59, 0
  %vm67 = vcmask 1041408
  %v69 = vsel %vm67, %v25, 0
  %71 = vmatprep.subr.bf16.mxu0 0
  %72 = vmatpush1.bf16.msra.mxu0 %v69
  %73 = vmatprep.subr.bf16.mxu0 0
  %74 = vmatpush1.bf16.msra.mxu0 0
  %75 = vmatprep.subr.bf16.mxu0 0
  %76 = vmatpush1.bf16.msra.mxu0 0
  %77 = vmatprep.subr.bf16.mxu0 0
  %78 = vmatpush1.bf16.msra.mxu0 0
  %79 = vmatprep.subr.bf16.mxu0 0
  %80 = vmatpush1.bf16.msra.mxu0 0
  %81 = vmatprep.subr.bf16.mxu0 0
  %82 = vmatpush1.bf16.msra.mxu0 0
  %83 = vmatprep.subr.bf16.mxu0 0
  %84 = vmatpush1.bf16.msra.mxu0 0
  %85 = vmatprep.subr.bf16.mxu0 0
  %86 = vmatpush1.bf16.msra.mxu0 0
  %87 = vmatprep.subr.bf16.mxu0 0
  %88 = vmatpush1.bf16.msra.mxu0 0
  %89 = vmatprep.subr.bf16.mxu0 0
  %90 = vmatpush1.bf16.msra.mxu0 0
  %91 = vmatprep.subr.bf16.mxu0 0
  %92 = vmatpush1.bf16.msra.mxu0 0
  %93 = vmatprep.subr.bf16.mxu0 0
  %94 = vmatpush1.bf16.msra.mxu0 0
  %95 = vmatprep.subr.bf16.mxu0 0
  %96 = vmatpush1.bf16.msra.mxu0 0
  %97 = vmatprep.subr.bf16.mxu0 0
  %98 = vmatpush1.bf16.msra.mxu0 0
  %99 = vmatprep.subr.bf16.mxu0 0
  %100 = vmatpush1.bf16.msra.mxu0 0
  %101 = vmatprep.subr.bf16.mxu0 0
  %102 = vmatpush1.bf16.msra.mxu0 0
  %103 = vmatprep.mubr.bf16.mxu0 0
  %104 = vmatmul.mubr.bf16.gmra.mrb[0].mxu0 %v62
  %v105 = vpop.f32.mrb[0].mxu0
  %v106 = vadd.f32 %v33, %v105
  %v107 = vpop.f32.mrb[0].mxu0
  %v108 = vpop.f32.mrb[0].mxu0
  %v109 = vadd.f32 %v38, %v108
  %v110 = vpop.f32.mrb[0].mxu0
  %111 = vmatprep.mubr.bf16.mxu0 0
  %112 = vmatmul.mubr.bf16.gmra.mrb[0].mxu0 %v65
  %v113 = vpop.f32.mrb[0].mxu0
  %v114 = vadd.f32 %v43, %v113
  %v115 = vpop.f32.mrb[0].mxu0
  %v116 = vpop.f32.mrb[0].mxu0
  %v117 = vadd.f32 %v48, %v116
  %v118 = vpop.f32.mrb[0].mxu0
  %119 = vdwg.mxu0
  %v120 = vmax.f32 %v106, 0.0
  %v121 = vmax.f32 %v109, 0.0
  %v122 = vmax.f32 %v114, 0.0
  %v123 = vmax.f32 %v117, 0.0
  %v124 = vld [vmem:[%s3] sm:$0x1]
  %v125 = vpack.c.bf16 %v121, %v120
  %v126 = vpack.c.bf16 %v123, %v122
  %v127 = vld [vmem:[%s4] sm:$0x3]
  %129 = vset.pattern.permute.xlu0 0
  %130 = vperm.xlu0 %129, %v127
  %v131 = vpop.permute.xlu0 %130
  %vm133 = vcmask 261120
  %v135 = vsel %vm133, %v124, 0
  %137 = vmatprep.subr.bf16.mxu0 0
  %138 = vmatpush1.bf16.msra.mxu0 %v125
  %139 = vmatprep.subr.bf16.mxu0 0
  %140 = vmatpush1.bf16.msra.mxu0 %v126
  %141 = vmatprep.subr.bf16.mxu0 0
  %142 = vmatpush1.bf16.msra.mxu0 0
  %143 = vmatprep.subr.bf16.mxu0 0
  %144 = vmatpush1.bf16.msra.mxu0 0
  %145 = vmatprep.subr.bf16.mxu0 0
  %146 = vmatpush1.bf16.msra.mxu0 0
  %147 = vmatprep.subr.bf16.mxu0 0
  %148 = vmatpush1.bf16.msra.mxu0 0
  %149 = vmatprep.subr.bf16.mxu0 0
  %150 = vmatpush1.bf16.msra.mxu0 0
  %151 = vmatprep.subr.bf16.mxu0 0
  %152 = vmatpush1.bf16.msra.mxu0 0
  %153 = vmatprep.subr.bf16.mxu0 0
  %154 = vmatpush1.bf16.msra.mxu0 0
  %155 = vmatprep.subr.bf16.mxu0 0
  %156 = vmatpush1.bf16.msra.mxu0 0
  %157 = vmatprep.subr.bf16.mxu0 0
  %158 = vmatpush1.bf16.msra.mxu0 0
  %159 = vmatprep.subr.bf16.mxu0 0
  %160 = vmatpush1.bf16.msra.mxu0 0
  %161 = vmatprep.subr.bf16.mxu0 0
  %162 = vmatpush1.bf16.msra.mxu0 0
  %163 = vmatprep.subr.bf16.mxu0 0
  %164 = vmatpush1.bf16.msra.mxu0 0
  %165 = vmatprep.subr.bf16.mxu0 0
  %166 = vmatpush1.bf16.msra.mxu0 0
  %167 = vmatprep.subr.bf16.mxu0 0
  %168 = vmatpush1.bf16.msra.mxu0 0
  %169 = vmatprep.mubr.bf16.mxu0 0
  %170 = vmatmul.mubr.bf16.gmra.mrb[0].mxu0 %v135
  %v171 = vpop.f32.mrb[0].mxu0
  %v172 = vadd.f32 %v131, %v171
  %v173 = vpop.f32.mrb[0].mxu0
  %v174 = vpop.f32.mrb[0].mxu0
  %v175 = vpop.f32.mrb[0].mxu0
  %176 = vdwg.mxu0
  %vm177 = vcmask 9216
  %178 = vst.msk [vmem:[%s5] sm:$0x3] %vm177, %v172
  // Predicated region
  $region22: #{qnetwork3_forward.1} parent=0 // pred_check
    _
  $region23: #{qnetwork3_forward.1} parent=0 // pred_check_branch
    %180 = sbr.rel (0) target = $region25
  $region24: #{qnetwork3_forward.1} parent=0 // pred_region
    _
  $region25: #{qnetwork3_forward.1} parent=0 // pred_fallthru
    _
  // Predicated region
  $region26: #{qnetwork3_forward.1} parent=0 // pred_check
    _
  $region27: #{qnetwork3_forward.1} parent=0 // pred_check_branch
    %182 = sbr.rel (0) target = $region29
  $region28: #{qnetwork3_forward.1} parent=0 // pred_region
    _
  $region29: #{qnetwork3_forward.1} parent=0 // pred_fallthru
    _

</llo_original>
